<compile_context>
chip_gen: v6e
topology: v6e:2x2x1
jax: 0.10.0
libtpu: 0.0.40
codegen_flags: <defaults>
</compile_context>

<pallas_src>
import functools

import numpy as np
import jax
import jax.numpy as jnp
from jax.experimental import pallas as pl
from jax.experimental.pallas import tpu as pltpu

_EPS = 1e-5


def _sublane_pack(dtype) -> int:
    """Sublane packing for the dtype: 8 (f32), 16 (bf16), 32 (int8/fp8)."""
    itemsize = np.dtype(dtype).itemsize
    return max(8, 8 * (4 // max(1, itemsize)))


@functools.lru_cache(maxsize=None)
def _vmem_capacity_bytes() -> int:
    try:
        cap = int(getattr(pltpu.get_tpu_info(), "vmem_capacity_bytes", 0))
        if cap > 0:
            return cap
    except Exception:
        pass
    return 64 * 1024 * 1024          # conservative fallback: v7x per-core VMEM


@functools.lru_cache(maxsize=None)
def _budgets():
    """(per-step tile working-set budget, scoped vmem_limit_bytes)."""
    cap = _vmem_capacity_bytes()
    tile_budget = max(4 * 1024 * 1024, int(0.35 * cap))   # ~22 MiB v7x, ~45 MiB v5e/v6e
    vmem_limit = int(0.75 * cap)
    return tile_budget, vmem_limit


def _pick_fold(rows: int, C: int) -> int:
    """Fold factor g: pack g rows of width C onto the lane axis (g*C <= 128).
    Requires rows % g == 0 so the wrapper reshape is a pure re-view."""
    if C >= 128:
        return 1
    for g in (8, 4, 2):
        if g * C <= 128 and rows % g == 0:
            return g
    return 1


def _pick_tile_rows(rows_eff: int, C_eff: int, dtype) -> int:
    itemsize = np.dtype(dtype).itemsize
    pack = _sublane_pack(dtype)
    if rows_eff <= pack:
        return int(rows_eff)                       # single full-extent block
    rows_padded = -(-rows_eff // pack) * pack
    tile_budget, _ = _budgets()
    # Per tile-row VMEM bytes: double-buffered in+out (4*C*itemsize) plus the
    # ~3 full-tile f32 temporaries created in the kernel (12*C bytes).
    bytes_per_row = 4 * C_eff * itemsize + 12 * C_eff
    t = tile_budget // max(1, bytes_per_row)
    t = min(t, rows_padded)
    # Keep >= 2 grid blocks so the "parallel" axis can shard across both
    # TensorCores on v7x (no effect on single-core v5e/v6e).
    if t >= rows_padded and rows_padded >= 2 * pack:
        half = (rows_padded + 1) // 2
        t = -(-half // pack) * pack
    t = max(pack, (t // pack) * pack)
    return int(t)


def _biasfree_ln_kernel(x_ref, w_ref, o_ref, *, g, C):
    # x_ref / o_ref: (tile_rows, g*C), w_ref: (1, g*C).
    # Each kernel row holds g independent original rows as contiguous lane
    # segments of width C.  All reductions are per-row / per-segment, so the
    # garbage overhang of a partial last block cannot affect valid rows.
    x = x_ref[...].astype(jnp.float32)
    w = w_ref[...].astype(jnp.float32)

    if g == 1:
        mu = jnp.mean(x, axis=-1, keepdims=True)
        cen = x - mu
        var = jnp.mean(cen * cen, axis=-1, keepdims=True)    # two-pass variance
        inv = jax.lax.rsqrt(var + _EPS)
        o_ref[...] = (x * inv * w).astype(o_ref.dtype)
        return

    gc = g * C
    inv_c = 1.0 / C
    lane = jax.lax.broadcasted_iota(jnp.int32, (1, gc), 1)
    masks = [jnp.logical_and(lane >= k * C, lane < (k + 1) * C) for k in range(g)]

    # Segmented mean: g masked full-row lane reductions (exact f32; VPU + XLU,
    # both of which have slack in this HBM-bound kernel).
    mu_b = jnp.zeros_like(x)
    for k in range(g):
        s = jnp.sum(jnp.where(masks[k], x, 0.0), axis=-1, keepdims=True) * inv_c
        mu_b = jnp.where(masks[k], s, mu_b)

    cen = x - mu_b
    cen2 = cen * cen

    # Segmented two-pass variance.
    var_b = jnp.zeros_like(x)
    for k in range(g):
        s = jnp.sum(jnp.where(masks[k], cen2, 0.0), axis=-1, keepdims=True) * inv_c
        var_b = jnp.where(masks[k], s, var_b)

    inv = jax.lax.rsqrt(var_b + _EPS)
    o_ref[...] = (x * inv * w).astype(o_ref.dtype)


@functools.partial(jax.jit, static_argnames=("tile_rows",))
def biasfree_layernorm(x, weight, *, tile_rows=None):
    """x: (..., C); weight: (C,). Returns the same shape/dtype as x."""
    orig_shape = x.shape
    C = int(orig_shape[-1])
    rows = 1
    for d in orig_shape[:-1]:
        rows *= int(d)

    g = _pick_fold(rows, C)
    rows_eff = rows // g
    C_eff = g * C

    if tile_rows is None:
        tile_rows = _pick_tile_rows(rows_eff, C_eff, x.dtype)

    x2 = x.reshape(rows_eff, C_eff)
    w2 = (jnp.tile(weight, g) if g > 1 else weight).reshape(1, C_eff)

    num_blocks = pl.cdiv(rows_eff, tile_rows)

    itemsize = np.dtype(x.dtype).itemsize
    cost = pl.CostEstimate(
        flops=7 * rows * C,
        transcendentals=rows,                                  # one rsqrt per row
        bytes_accessed=2 * rows * C * itemsize
        + C * np.dtype(weight.dtype).itemsize,
    )

    _, vmem_limit = _budgets()
    kernel = functools.partial(_biasfree_ln_kernel, g=g, C=C)

    out = pl.pallas_call(
        kernel,
        out_shape=jax.ShapeDtypeStruct((rows_eff, C_eff), x.dtype),
        grid_spec=pltpu.PrefetchScalarGridSpec(
            num_scalar_prefetch=0,
            grid=(num_blocks,),
            in_specs=[
                pl.BlockSpec((tile_rows, C_eff), lambda i: (i, 0)),
                pl.BlockSpec((1, C_eff), lambda i: (0, 0)),
            ],
            out_specs=pl.BlockSpec((tile_rows, C_eff), lambda i: (i, 0)),
        ),
        compiler_params=pltpu.CompilerParams(
            dimension_semantics=("parallel",),
            vmem_limit_bytes=vmem_limit,
        ),
        cost_estimate=cost,
    )(x2, w2)

    return out.reshape(orig_shape)


def _reference(x, weight):
    sigma = jnp.var(x, axis=-1, keepdims=True)
    return x / jnp.sqrt(sigma + _EPS) * weight


if __name__ == "__main__":
    key = jax.random.PRNGKey(0)
    k1, k2, k3, k4 = jax.random.split(key, 4)

    # 1) Typical (batch, seq, hidden) with hidden == normalized_shape.
    #    C=32 < 128 -> exercises the lane-folded path (g=4 -> 128-lane tiles).
    x1 = jax.random.normal(k1, (2, 8, 32), dtype=jnp.float32)
    w1 = jnp.ones((32,), dtype=jnp.float32)       # nn.Parameter(torch.ones(C)) init
    o1 = jax.block_until_ready(biasfree_layernorm(x1, w1))
    assert o1.shape == x1.shape and o1.dtype == x1.dtype
    assert jnp.allclose(o1, _reference(x1, w1), atol=2e-5, rtol=2e-5)

    # 2) rows (= 39) not divisible by any fold factor and not a multiple of the
    #    tile -> unfolded path + masked partial last grid block.
    x2 = jax.random.normal(k2, (3, 13, 32), dtype=jnp.float32)
    o2 = jax.block_until_ready(biasfree_layernorm(x2, w1, tile_rows=8))
    assert o2.shape == x2.shape and o2.dtype == x2.dtype
    assert jnp.allclose(o2, _reference(x2, w1), atol=2e-5, rtol=2e-5)

    # 3) Non-trivial weight, folded path (g=2) with a 2-block parallel grid.
    x3 = jax.random.normal(k3, (2, 32, 64), dtype=jnp.float32)
    w3 = jax.random.normal(k4, (64,), dtype=jnp.float32)
    o3 = jax.block_until_ready(biasfree_layernorm(x3, w3))
    assert o3.shape == x3.shape and o3.dtype == x3.dtype
    assert jnp.allclose(o3, _reference(x3, w3), atol=2e-5, rtol=2e-5)

    print("KERNEL_OK")
</pallas_src>

<mosaic_0001>
module attributes {stable_mosaic.version = 11 : i64} {
  func.func @_biasfree_ln_kernel(%arg0: i32, %arg1: memref<4x128xf32, #tpu.memory_space<vmem>>, %arg2: memref<1x128xf32, #tpu.memory_space<vmem>>, %arg3: memref<4x128xf32, #tpu.memory_space<vmem>>) attributes {dimension_semantics = [#tpu.dimension_semantics<parallel>], iteration_bounds = array<i64: 1>, scalar_prefetch = 0 : i64, scratch_operands = 0 : i64, tpu.core_type = #tpu.core_type<tc>, window_params = [{transform_indices = @transform_0, window_bounds = array<i64: 4, 128>}, {pipeline_mode = #tpu.pipeline_mode<synchronous>, transform_indices = @transform_1, window_bounds = array<i64: 1, 128>}, {transform_indices = @transform_2, window_bounds = array<i64: 4, 128>}]} {
    %c0 = arith.constant 0 : index
    %c0_0 = arith.constant 0 : index
    %0 = vector.load %arg1[%c0, %c0_0] : memref<4x128xf32, #tpu.memory_space<vmem>>, vector<4x128xf32>
    %c0_1 = arith.constant 0 : index
    %c0_2 = arith.constant 0 : index
    %1 = vector.load %arg2[%c0_1, %c0_2] : memref<1x128xf32, #tpu.memory_space<vmem>>, vector<1x128xf32>
    %2 = tpu.iota {dimensions = array<i32: 1>} : vector<1x128xi32>
    %c0_i32 = arith.constant 0 : i32
    %3 = vector.broadcast %c0_i32 : i32 to vector<1x128xi32>
    %4 = arith.cmpi sge, %2, %3 : vector<1x128xi32>
    %c32_i32 = arith.constant 32 : i32
    %5 = vector.broadcast %c32_i32 : i32 to vector<1x128xi32>
    %6 = arith.cmpi slt, %2, %5 : vector<1x128xi32>
    %7 = arith.andi %4, %6 : vector<1x128xi1>
    %c32_i32_3 = arith.constant 32 : i32
    %8 = vector.broadcast %c32_i32_3 : i32 to vector<1x128xi32>
    %9 = arith.cmpi sge, %2, %8 : vector<1x128xi32>
    %c64_i32 = arith.constant 64 : i32
    %10 = vector.broadcast %c64_i32 : i32 to vector<1x128xi32>
    %11 = arith.cmpi slt, %2, %10 : vector<1x128xi32>
    %12 = arith.andi %9, %11 : vector<1x128xi1>
    %c64_i32_4 = arith.constant 64 : i32
    %13 = vector.broadcast %c64_i32_4 : i32 to vector<1x128xi32>
    %14 = arith.cmpi sge, %2, %13 : vector<1x128xi32>
    %c96_i32 = arith.constant 96 : i32
    %15 = vector.broadcast %c96_i32 : i32 to vector<1x128xi32>
    %16 = arith.cmpi slt, %2, %15 : vector<1x128xi32>
    %17 = arith.andi %14, %16 : vector<1x128xi1>
    %c96_i32_5 = arith.constant 96 : i32
    %18 = vector.broadcast %c96_i32_5 : i32 to vector<1x128xi32>
    %19 = arith.cmpi sge, %2, %18 : vector<1x128xi32>
    %c128_i32 = arith.constant 128 : i32
    %20 = vector.broadcast %c128_i32 : i32 to vector<1x128xi32>
    %21 = arith.cmpi slt, %2, %20 : vector<1x128xi32>
    %22 = arith.andi %19, %21 : vector<1x128xi1>
    %cst = arith.constant 0.000000e+00 : f32
    %23 = vector.broadcast %cst : f32 to vector<4x128xf32>
    %cst_6 = arith.constant 0.000000e+00 : f32
    %24 = vector.shape_cast %7 : vector<1x128xi1> to vector<1x128xi1>
    %25 = vector.broadcast %24 : vector<1x128xi1> to vector<4x128xi1>
    %26 = vector.broadcast %cst_6 : f32 to vector<4x128xf32>
    %27 = arith.select %25, %0, %26 : vector<4x128xi1>, vector<4x128xf32>
    %cst_7 = arith.constant dense<0.000000e+00> : vector<4xf32>
    %28 = vector.multi_reduction <add>, %27, %cst_7 [1] : vector<4x128xf32> to vector<4xf32>
    %29 = vector.shape_cast %28 : vector<4xf32> to vector<4x1xf32>
    %cst_8 = arith.constant 3.125000e-02 : f32
    %30 = vector.broadcast %cst_8 : f32 to vector<4x1xf32>
    %31 = arith.mulf %29, %30 : vector<4x1xf32>
    %32 = vector.shape_cast %7 : vector<1x128xi1> to vector<1x128xi1>
    %33 = vector.broadcast %32 : vector<1x128xi1> to vector<4x128xi1>
    %34 = vector.shape_cast %31 : vector<4x1xf32> to vector<4x1xf32>
    %35 = vector.broadcast %34 : vector<4x1xf32> to vector<4x128xf32>
    %36 = arith.select %33, %35, %23 : vector<4x128xi1>, vector<4x128xf32>
    %cst_9 = arith.constant 0.000000e+00 : f32
    %37 = vector.shape_cast %12 : vector<1x128xi1> to vector<1x128xi1>
    %38 = vector.broadcast %37 : vector<1x128xi1> to vector<4x128xi1>
    %39 = vector.broadcast %cst_9 : f32 to vector<4x128xf32>
    %40 = arith.select %38, %0, %39 : vector<4x128xi1>, vector<4x128xf32>
    %cst_10 = arith.constant dense<0.000000e+00> : vector<4xf32>
    %41 = vector.multi_reduction <add>, %40, %cst_10 [1] : vector<4x128xf32> to vector<4xf32>
    %42 = vector.shape_cast %41 : vector<4xf32> to vector<4x1xf32>
    %cst_11 = arith.constant 3.125000e-02 : f32
    %43 = vector.broadcast %cst_11 : f32 to vector<4x1xf32>
    %44 = arith.mulf %42, %43 : vector<4x1xf32>
    %45 = vector.shape_cast %12 : vector<1x128xi1> to vector<1x128xi1>
    %46 = vector.broadcast %45 : vector<1x128xi1> to vector<4x128xi1>
    %47 = vector.shape_cast %44 : vector<4x1xf32> to vector<4x1xf32>
    %48 = vector.broadcast %47 : vector<4x1xf32> to vector<4x128xf32>
    %49 = arith.select %46, %48, %36 : vector<4x128xi1>, vector<4x128xf32>
    %cst_12 = arith.constant 0.000000e+00 : f32
    %50 = vector.shape_cast %17 : vector<1x128xi1> to vector<1x128xi1>
    %51 = vector.broadcast %50 : vector<1x128xi1> to vector<4x128xi1>
    %52 = vector.broadcast %cst_12 : f32 to vector<4x128xf32>
    %53 = arith.select %51, %0, %52 : vector<4x128xi1>, vector<4x128xf32>
    %cst_13 = arith.constant dense<0.000000e+00> : vector<4xf32>
    %54 = vector.multi_reduction <add>, %53, %cst_13 [1] : vector<4x128xf32> to vector<4xf32>
    %55 = vector.shape_cast %54 : vector<4xf32> to vector<4x1xf32>
    %cst_14 = arith.constant 3.125000e-02 : f32
    %56 = vector.broadcast %cst_14 : f32 to vector<4x1xf32>
    %57 = arith.mulf %55, %56 : vector<4x1xf32>
    %58 = vector.shape_cast %17 : vector<1x128xi1> to vector<1x128xi1>
    %59 = vector.broadcast %58 : vector<1x128xi1> to vector<4x128xi1>
    %60 = vector.shape_cast %57 : vector<4x1xf32> to vector<4x1xf32>
    %61 = vector.broadcast %60 : vector<4x1xf32> to vector<4x128xf32>
    %62 = arith.select %59, %61, %49 : vector<4x128xi1>, vector<4x128xf32>
    %cst_15 = arith.constant 0.000000e+00 : f32
    %63 = vector.shape_cast %22 : vector<1x128xi1> to vector<1x128xi1>
    %64 = vector.broadcast %63 : vector<1x128xi1> to vector<4x128xi1>
    %65 = vector.broadcast %cst_15 : f32 to vector<4x128xf32>
    %66 = arith.select %64, %0, %65 : vector<4x128xi1>, vector<4x128xf32>
    %cst_16 = arith.constant dense<0.000000e+00> : vector<4xf32>
    %67 = vector.multi_reduction <add>, %66, %cst_16 [1] : vector<4x128xf32> to vector<4xf32>
    %68 = vector.shape_cast %67 : vector<4xf32> to vector<4x1xf32>
    %cst_17 = arith.constant 3.125000e-02 : f32
    %69 = vector.broadcast %cst_17 : f32 to vector<4x1xf32>
    %70 = arith.mulf %68, %69 : vector<4x1xf32>
    %71 = vector.shape_cast %22 : vector<1x128xi1> to vector<1x128xi1>
    %72 = vector.broadcast %71 : vector<1x128xi1> to vector<4x128xi1>
    %73 = vector.shape_cast %70 : vector<4x1xf32> to vector<4x1xf32>
    %74 = vector.broadcast %73 : vector<4x1xf32> to vector<4x128xf32>
    %75 = arith.select %72, %74, %62 : vector<4x128xi1>, vector<4x128xf32>
    %76 = arith.subf %0, %75 : vector<4x128xf32>
    %77 = arith.mulf %76, %76 : vector<4x128xf32>
    %cst_18 = arith.constant 0.000000e+00 : f32
    %78 = vector.broadcast %cst_18 : f32 to vector<4x128xf32>
    %cst_19 = arith.constant 0.000000e+00 : f32
    %79 = vector.shape_cast %7 : vector<1x128xi1> to vector<1x128xi1>
    %80 = vector.broadcast %79 : vector<1x128xi1> to vector<4x128xi1>
    %81 = vector.broadcast %cst_19 : f32 to vector<4x128xf32>
    %82 = arith.select %80, %77, %81 : vector<4x128xi1>, vector<4x128xf32>
    %cst_20 = arith.constant dense<0.000000e+00> : vector<4xf32>
    %83 = vector.multi_reduction <add>, %82, %cst_20 [1] : vector<4x128xf32> to vector<4xf32>
    %84 = vector.shape_cast %83 : vector<4xf32> to vector<4x1xf32>
    %cst_21 = arith.constant 3.125000e-02 : f32
    %85 = vector.broadcast %cst_21 : f32 to vector<4x1xf32>
    %86 = arith.mulf %84, %85 : vector<4x1xf32>
    %87 = vector.shape_cast %7 : vector<1x128xi1> to vector<1x128xi1>
    %88 = vector.broadcast %87 : vector<1x128xi1> to vector<4x128xi1>
    %89 = vector.shape_cast %86 : vector<4x1xf32> to vector<4x1xf32>
    %90 = vector.broadcast %89 : vector<4x1xf32> to vector<4x128xf32>
    %91 = arith.select %88, %90, %78 : vector<4x128xi1>, vector<4x128xf32>
    %cst_22 = arith.constant 0.000000e+00 : f32
    %92 = vector.shape_cast %12 : vector<1x128xi1> to vector<1x128xi1>
    %93 = vector.broadcast %92 : vector<1x128xi1> to vector<4x128xi1>
    %94 = vector.broadcast %cst_22 : f32 to vector<4x128xf32>
    %95 = arith.select %93, %77, %94 : vector<4x128xi1>, vector<4x128xf32>
    %cst_23 = arith.constant dense<0.000000e+00> : vector<4xf32>
    %96 = vector.multi_reduction <add>, %95, %cst_23 [1] : vector<4x128xf32> to vector<4xf32>
    %97 = vector.shape_cast %96 : vector<4xf32> to vector<4x1xf32>
    %cst_24 = arith.constant 3.125000e-02 : f32
    %98 = vector.broadcast %cst_24 : f32 to vector<4x1xf32>
    %99 = arith.mulf %97, %98 : vector<4x1xf32>
    %100 = vector.shape_cast %12 : vector<1x128xi1> to vector<1x128xi1>
    %101 = vector.broadcast %100 : vector<1x128xi1> to vector<4x128xi1>
    %102 = vector.shape_cast %99 : vector<4x1xf32> to vector<4x1xf32>
    %103 = vector.broadcast %102 : vector<4x1xf32> to vector<4x128xf32>
    %104 = arith.select %101, %103, %91 : vector<4x128xi1>, vector<4x128xf32>
    %cst_25 = arith.constant 0.000000e+00 : f32
    %105 = vector.shape_cast %17 : vector<1x128xi1> to vector<1x128xi1>
    %106 = vector.broadcast %105 : vector<1x128xi1> to vector<4x128xi1>
    %107 = vector.broadcast %cst_25 : f32 to vector<4x128xf32>
    %108 = arith.select %106, %77, %107 : vector<4x128xi1>, vector<4x128xf32>
    %cst_26 = arith.constant dense<0.000000e+00> : vector<4xf32>
    %109 = vector.multi_reduction <add>, %108, %cst_26 [1] : vector<4x128xf32> to vector<4xf32>
    %110 = vector.shape_cast %109 : vector<4xf32> to vector<4x1xf32>
    %cst_27 = arith.constant 3.125000e-02 : f32
    %111 = vector.broadcast %cst_27 : f32 to vector<4x1xf32>
    %112 = arith.mulf %110, %111 : vector<4x1xf32>
    %113 = vector.shape_cast %17 : vector<1x128xi1> to vector<1x128xi1>
    %114 = vector.broadcast %113 : vector<1x128xi1> to vector<4x128xi1>
    %115 = vector.shape_cast %112 : vector<4x1xf32> to vector<4x1xf32>
    %116 = vector.broadcast %115 : vector<4x1xf32> to vector<4x128xf32>
    %117 = arith.select %114, %116, %104 : vector<4x128xi1>, vector<4x128xf32>
    %cst_28 = arith.constant 0.000000e+00 : f32
    %118 = vector.shape_cast %22 : vector<1x128xi1> to vector<1x128xi1>
    %119 = vector.broadcast %118 : vector<1x128xi1> to vector<4x128xi1>
    %120 = vector.broadcast %cst_28 : f32 to vector<4x128xf32>
    %121 = arith.select %119, %77, %120 : vector<4x128xi1>, vector<4x128xf32>
    %cst_29 = arith.constant dense<0.000000e+00> : vector<4xf32>
    %122 = vector.multi_reduction <add>, %121, %cst_29 [1] : vector<4x128xf32> to vector<4xf32>
    %123 = vector.shape_cast %122 : vector<4xf32> to vector<4x1xf32>
    %cst_30 = arith.constant 3.125000e-02 : f32
    %124 = vector.broadcast %cst_30 : f32 to vector<4x1xf32>
    %125 = arith.mulf %123, %124 : vector<4x1xf32>
    %126 = vector.shape_cast %22 : vector<1x128xi1> to vector<1x128xi1>
    %127 = vector.broadcast %126 : vector<1x128xi1> to vector<4x128xi1>
    %128 = vector.shape_cast %125 : vector<4x1xf32> to vector<4x1xf32>
    %129 = vector.broadcast %128 : vector<4x1xf32> to vector<4x128xf32>
    %130 = arith.select %127, %129, %117 : vector<4x128xi1>, vector<4x128xf32>
    %cst_31 = arith.constant 9.99999974E-6 : f32
    %131 = vector.broadcast %cst_31 : f32 to vector<4x128xf32>
    %132 = arith.addf %130, %131 : vector<4x128xf32>
    %133 = math.rsqrt %132 : vector<4x128xf32>
    %134 = arith.mulf %0, %133 : vector<4x128xf32>
    %135 = vector.broadcast %1 : vector<1x128xf32> to vector<4x128xf32>
    %136 = arith.mulf %134, %135 : vector<4x128xf32>
    %c0_32 = arith.constant 0 : index
    %c0_33 = arith.constant 0 : index
    %137 = vector.load %arg3[%c0_32, %c0_33] : memref<4x128xf32, #tpu.memory_space<vmem>>, vector<4x128xf32>
    tpu.vector_store %arg3[%c0_32, %c0_33], %136 {strides = array<i32>} : memref<4x128xf32, #tpu.memory_space<vmem>>, vector<4x128xf32>,
    return
  }
  func.func @transform_0(%arg0: i32) -> (i32, i32) {
    %c0_i32 = arith.constant 0 : i32
    %c0_i32_0 = arith.constant 0 : i32
    return %arg0, %c0_i32 : i32, i32
  }
  func.func @transform_1(%arg0: i32) -> (i32, i32) {
    %c0_i32 = arith.constant 0 : i32
    %c0_i32_0 = arith.constant 0 : i32
    %c0_i32_1 = arith.constant 0 : i32
    return %c0_i32, %c0_i32_0 : i32, i32
  }
  func.func @transform_2(%arg0: i32) -> (i32, i32) {
    %c0_i32 = arith.constant 0 : i32
    %c0_i32_0 = arith.constant 0 : i32
    return %arg0, %c0_i32 : i32, i32
  }
}

</mosaic_0001>

<llo_original>
// kernel: tile.9
$region0: #{tile.9}
  %s0 = inlined_call_operand.vmem [shape: f32[4,32], index: 0, kind: input, shape index: {}]
  %s1 = inlined_call_operand.vmem [shape: f32[1,128], index: 1, kind: output, shape index: {}]
  $region1: #{tile.9} parent=0
    #allocation0 [shape = 'u8[4096]{0}', space=vmem, size = 0x1000, scoped, tag = 'scoped mem for output reshape']
    #allocation1 [shape = 'u8[4096]{0}', space=vmem, size = 0x1000, scoped, tag = 'scoped mem for input reshape']
    %s3 = sshll.u32 1, 4
    %s4 = ssub.s32 %s3, 1
    %v5 = vld [vmem:[%s0] sm:%s4]
    %6 = vst [vmem:[#allocation1] sm:%s4] %v5
    %v7 = vld [vmem:[#allocation1] sm:$0x1]
    %vm8 = vcmask 261120
    %9 = vst.msk [vmem:[#allocation0] sm:$0x1] %vm8, %v7
    %s10 = scalar_lea.vmem [#allocation1], 3
    %v11 = vld [vmem:[%s10] sm:$0x1]
    %12 = vrot.lane.b32.xlu0 %v11, 96
    %v13 = vpop.permute.xlu0 %12
    %vm14 = vcmask 1048320
    %15 = vst.msk [vmem:[#allocation0] sm:$0x1] %vm14, %v13
    %s16 = scalar_lea.vmem [#allocation1], 2
    %v17 = vld [vmem:[%s16] sm:$0x1]
    %18 = vrot.lane.b32.xlu0 %v17, 64
    %v19 = vpop.permute.xlu0 %18
    %vm20 = vcmask 785920
    %21 = vst.msk [vmem:[#allocation0] sm:$0x1] %vm20, %v19
    %s22 = scalar_lea.vmem [#allocation1], 1
    %v23 = vld [vmem:[%s22] sm:$0x1]
    %24 = vrot.lane.b32.xlu0 %v23, 32
    %v25 = vpop.permute.xlu0 %24
    %vm26 = vcmask 523520
    %27 = vst.msk [vmem:[#allocation0] sm:$0x1] %vm26, %v25
    %s29 = sshll.u32 1, 1
    %s30 = ssub.s32 %s29, 1
    %v32 = vld [vmem:[#allocation0] sm:%s30]
    %s33 = sshll.u32 1, 1
    %s34 = ssub.s32 %s33, 1
    %35 = vst [vmem:[%s1] sm:%s34] %v32

// kernel: tile.8
$region0: #{tile.8}
  #allocation0 [shape = 's32[1]{0}', space=sflag, size = 0x4, scoped, tag = 'scoped memory for tile.8']
  %s0 = inlined_call_operand.vmem [shape: f32[32], index: 0, kind: input, shape index: {}]
  %s1 = inlined_call_operand.vmem [shape: f32[4,32], index: 1, kind: output, shape index: {}]
  // Predicated region
  $region2: #{tile.8} parent=0 // pred_check
    _
  $region3: #{tile.8} parent=0 // pred_check_branch
    %3 = sbr.rel (0) target = $region5
  $region4: #{tile.8} parent=0 // pred_region
    _
  $region5: #{tile.8} parent=0 // pred_fallthru
    _
  %v4 = vld [vmem:[%s0] ss:$0 sm:$0xff]
  %5 = vst [vmem:[%s1] sm:$0xf] %v4

// kernel: biasfree_layernorm.1
$region0: #{biasfree_layernorm.1}
  #allocation0 [shape = 'u32[]', space=smem, size = 0x4, offset = 0x4, fixed_abs, tag = 'smem constant byte address 0x4 - core index']
  #allocation1 [shape = 'u32[144,128]{1,0:T(1,128)}', space=vmem, size = 0x12000, scoped, tag = 'internal scratch']
  %s0 = inlined_call_operand.vmem [shape: f32[4,128], index: 0, kind: input, shape index: {}]
  %s1 = inlined_call_operand.vmem [shape: f32[1,128], index: 1, kind: input, shape index: {}]
  %s2 = inlined_call_operand.vmem [shape: f32[4,128], index: 2, kind: output, shape index: {}]
  %s3 = sld [smem:[#allocation0]]
  $region18: #{biasfree_layernorm.1} parent=0
    _
  %s5 = ssub.s32 1, %s3
  %s6 = scalar_select 0, %s5, %s3
  // Predicated region
  $region2: #{biasfree_layernorm.1} parent=0 // pred_check
    _
  $region3: #{biasfree_layernorm.1} parent=0 // pred_check_branch
    %8 = sbr.rel (0) target = $region5
  $region4: #{biasfree_layernorm.1} parent=0 // pred_region
    _
  $region5: #{biasfree_layernorm.1} parent=0 // pred_fallthru
    _
  // Predicated region
  $region6: #{biasfree_layernorm.1} parent=0 // pred_check
    _
  $region7: #{biasfree_layernorm.1} parent=0 // pred_check_branch
    %10 = sbr.rel (0) target = $region9
  $region8: #{biasfree_layernorm.1} parent=0 // pred_region
    _
  $region9: #{biasfree_layernorm.1} parent=0 // pred_fallthru
    _
  %v11 = vld [vmem:[%s0] sm:$0xf]
  %v12 = vld [vmem:[%s1] sm:$0x1]
  %v13 = vlaneseq
  %v14 = vand.u32 %v13, 127
  %vm15 = vcmp.ge.s32.totalorder %v14, 0
  %vm16 = vcmp.lt.s32.totalorder %v14, 32
  %vm17 = vmand %vm15, %vm16
  %vm18 = vcmp.ge.s32.totalorder %v14, 32
  %vm19 = vcmp.lt.s32.totalorder %v14, 64
  %vm20 = vmand %vm18, %vm19
  %vm21 = vcmp.ge.s32.totalorder %v14, 64
  %vm22 = vcmp.lt.s32.totalorder %v14, 96
  %vm23 = vmand %vm21, %vm22
  %vm24 = vcmp.ge.s32.totalorder %v14, 96
  %vm25 = vcmp.lt.s32.totalorder %v14, 128
  %vm26 = vmand %vm24, %vm25
  %v27 = vsel %vm17, 1, 0
  %vm28 = vcmp.eq.s32.totalorder %v27, 1
  %v29 = vsel %vm28, %v11, 0.0
  %vm30 = vcmask 1043456
  %v31 = vsel %vm30, %v29, 0.0
  %32 = vadd.xlane.f32.xlu0 %v31
  %v33 = vpop.xlane.xlu0 %32
  %v34 = vmul.f32 %v33, 0.03125
  %v35 = vsel %vm28, %v34, 0.0
  %v36 = vsel %vm20, 1, 0
  %vm37 = vcmp.eq.s32.totalorder %v36, 1
  %v38 = vsel %vm37, %v11, 0.0
  %v39 = vsel %vm30, %v38, 0.0
  %40 = vadd.xlane.f32.xlu0 %v39
  %v41 = vpop.xlane.xlu0 %40
  %v42 = vmul.f32 %v41, 0.03125
  %v43 = vsel %vm37, %v42, %v35
  %v44 = vsel %vm23, 1, 0
  %vm45 = vcmp.eq.s32.totalorder %v44, 1
  %v46 = vsel %vm45, %v11, 0.0
  %v47 = vsel %vm30, %v46, 0.0
  %48 = vadd.xlane.f32.xlu0 %v47
  %v49 = vpop.xlane.xlu0 %48
  %v50 = vmul.f32 %v49, 0.03125
  %v51 = vsel %vm45, %v50, %v43
  %v52 = vsel %vm26, 1, 0
  %vm53 = vcmp.eq.s32.totalorder %v52, 1
  %v54 = vsel %vm53, %v11, 0.0
  %v55 = vsel %vm30, %v54, 0.0
  %56 = vadd.xlane.f32.xlu0 %v55
  %v57 = vpop.xlane.xlu0 %56
  %v58 = vmul.f32 %v57, 0.03125
  %v59 = vsel %vm53, %v58, %v51
  %v60 = vsub.f32 %v11, %v59
  %v61 = vmul.f32 %v60, %v60
  %v62 = vsel %vm28, %v61, 0.0
  %v63 = vsel %vm30, %v62, 0.0
  %64 = vadd.xlane.f32.xlu0 %v63
  %v65 = vpop.xlane.xlu0 %64
  %v66 = vmul.f32 %v65, 0.03125
  %v67 = vsel %vm28, %v66, 0.0
  %v68 = vsel %vm37, %v61, 0.0
  %v69 = vsel %vm30, %v68, 0.0
  %70 = vadd.xlane.f32.xlu0 %v69
  %v71 = vpop.xlane.xlu0 %70
  %v72 = vmul.f32 %v71, 0.03125
  %v73 = vsel %vm37, %v72, %v67
  %v74 = vsel %vm45, %v61, 0.0
  %v75 = vsel %vm30, %v74, 0.0
  %76 = vadd.xlane.f32.xlu0 %v75
  %v77 = vpop.xlane.xlu0 %76
  %v78 = vmul.f32 %v77, 0.03125
  %v79 = vsel %vm45, %v78, %v73
  %v80 = vsel %vm53, %v61, 0.0
  %v81 = vsel %vm30, %v80, 0.0
  %82 = vadd.xlane.f32.xlu0 %v81
  %v83 = vpop.xlane.xlu0 %82
  %v84 = vmul.f32 %v83, 0.03125
  %v85 = vsel %vm53, %v84, %v79
  %v86 = vadd.f32 %v85, 1e-05
  %v87 = vrsqrt.pop %v86
  %v88 = vmul.f32 %v11, %v87
  %v90 = vlaneseq
  %v91 = vshrl.u32 %v90, 7
  %v92 = vsub.s32 0, %v91
  %v93 = vrot.slane %v12, %v92
  %v95 = vmul.f32 %v88, %v93
  %96 = vst [vmem:[%s2] sm:$0xf] %v95
  // Predicated region
  $region10: #{biasfree_layernorm.1} parent=0 // pred_check
    _
  $region11: #{biasfree_layernorm.1} parent=0 // pred_check_branch
    %98 = sbr.rel (0) target = $region13
  $region12: #{biasfree_layernorm.1} parent=0 // pred_region
    _
  $region13: #{biasfree_layernorm.1} parent=0 // pred_fallthru
    _
  // Predicated region
  $region14: #{biasfree_layernorm.1} parent=0 // pred_check
    _
  $region15: #{biasfree_layernorm.1} parent=0 // pred_check_branch
    %100 = sbr.rel (0) target = $region17
  $region16: #{biasfree_layernorm.1} parent=0 // pred_region
    _
  $region17: #{biasfree_layernorm.1} parent=0 // pred_fallthru
    _

</llo_original>
